<compile_context>
chip_gen: v7x
topology: tpu7x:2x2x1
jax: 0.10.0
libtpu: 0.0.40
codegen_flags: <defaults>
</compile_context>

<pallas_src>
import functools

import jax
import jax.numpy as jnp
from jax.experimental import pallas as pl
from jax.experimental.pallas import tpu as pltpu


def _outconv_kernel(x_ref, w_ref, b_ref, o_ref, *, sig: bool, bn: int):
    # x_ref: (bn, C_in, T)   w_ref: (C_out, C_in)   b_ref: (C_out, 1)
    # o_ref: (bn, C_out, T)  -- T is a multiple of 128 => lane-dense stores.
    w = w_ref[...]
    b = b_ref[...]
    # bn is a small static int -> unrolled; each iteration is a 2-D MXU dot
    # with the spatial axis on lanes and an f32 accumulator.
    for i in range(bn):
        y = jnp.dot(w, x_ref[i], preferred_element_type=jnp.float32)  # (C_out, T)
        y = y + b                                                     # bcast lanes
        if sig:
            y = jax.nn.sigmoid(y)
        o_ref[i] = y.astype(o_ref.dtype)


def _choose_tiles(N, HW, C_in, C_out, x_bytes, out_bytes,
                  target_block_bytes, max_bn=8):
    """Pick (bn, lane_tile) so each grid step moves ~target_block_bytes of
    in+out HBM traffic, lane_tile is a multiple of 128, and the grid keeps
    enough steps for megacore (2 TCs on v7x) to split the work."""
    bytes_per_col = C_in * x_bytes + C_out * out_bytes  # per (n, hw) column
    cols_target = max(1, target_block_bytes // bytes_per_col)

    hw_blocks_max = pl.cdiv(HW, 128)
    hw_rounded = hw_blocks_max * 128
    # lane_tile: multiple of 128, no larger than the (rounded-up) spatial axis.
    lane_tile = min(hw_rounded, max(128, (cols_target // 128) * 128))

    # If one whole image's worth of columns is still below the byte target,
    # extend the block across the batch axis (capped: it is unrolled in-kernel).
    bn = 1
    if lane_tile >= HW:
        bn = int(min(N, max_bn, max(1, cols_target // max(lane_tile, 1))))
        bn = max(bn, 1)

    # Keep at least min(4, max possible) grid steps so both v7x TCs get work.
    max_blocks = N * hw_blocks_max
    min_blocks = min(4, max_blocks)

    def grid_size(b, lt):
        return pl.cdiv(N, b) * pl.cdiv(HW, lt)

    while grid_size(bn, lane_tile) < min_blocks:
        if bn > 1:
            bn = max(1, bn // 2)
        elif lane_tile > 128:
            lane_tile = max(128, ((lane_tile // 2) // 128) * 128)
        else:
            break
    return bn, lane_tile


def outconv(x, weight, bias, *, sig: bool = True,
            target_block_bytes: int = 4 << 20,
            compute_dtype=None, out_dtype=None):
    """1x1 conv (+ sigmoid), matching nn.Conv2d(in_ch, out_ch, 1) -> Sigmoid.

    x:      (N, C_in, H, W)   NCHW, like PyTorch
    weight: (C_out, C_in, 1, 1)
    bias:   (C_out,)
    returns (N, C_out, H, W)

    compute_dtype / out_dtype: optionally cast x/weight (and the output) to
    e.g. jnp.bfloat16 to halve HBM traffic on v6e/v7x; accumulation stays f32.
    Default keeps f32 to match the PyTorch reference bit-for-bit tolerance.
    """
    N, C_in, H, W = x.shape
    C_out = weight.shape[0]
    HW = H * W

    # Reshapes of contiguous NCHW are free (no transposes, no pad, no slice).
    x3 = x.reshape(N, C_in, HW)
    w2 = weight.reshape(C_out, C_in)
    b2 = bias.reshape(C_out, 1).astype(jnp.float32)

    if compute_dtype is not None:
        x3 = x3.astype(compute_dtype)
        w2 = w2.astype(compute_dtype)
    if out_dtype is None:
        out_dtype = x.dtype

    x_bytes = jnp.dtype(x3.dtype).itemsize
    o_bytes = jnp.dtype(out_dtype).itemsize

    # Cap per-step block bytes so double-buffered in+out blocks stay well
    # below the explicit VMEM limit (and v7x's 64 MiB physical VMEM).
    target_block_bytes = min(int(target_block_bytes), 12 << 20)
    bn, lane_tile = _choose_tiles(N, HW, C_in, C_out, x_bytes, o_bytes,
                                  target_block_bytes)

    grid = (pl.cdiv(N, bn), pl.cdiv(HW, lane_tile))

    out3 = pl.pallas_call(
        functools.partial(_outconv_kernel, sig=sig, bn=bn),
        out_shape=jax.ShapeDtypeStruct((N, C_out, HW), out_dtype),
        grid_spec=pltpu.PrefetchScalarGridSpec(
            num_scalar_prefetch=0,
            grid=grid,
            in_specs=[
                # Activations: bn batch rows, all channels, lane-dense tile.
                # Ragged final blocks (batch or spatial) are masked by Pallas.
                pl.BlockSpec((bn, C_in, lane_tile), lambda n, j: (n, 0, j)),
                # Weight / bias: constant block index -> fetched once, reused.
                pl.BlockSpec((C_out, C_in), lambda n, j: (0, 0)),
                pl.BlockSpec((C_out, 1), lambda n, j: (0, 0)),
            ],
            out_specs=pl.BlockSpec((bn, C_out, lane_tile),
                                   lambda n, j: (n, 0, j)),
        ),
        compiler_params=pltpu.CompilerParams(
            # Disjoint output blocks on both axes -> fully parallel
            # (lets v7x's two TensorCores split the grid).
            dimension_semantics=("parallel", "parallel"),
            # Explicit scoped-VMEM limit: above v5e's 16 MiB default, within
            # every chip's physical VMEM, and >> our double-buffered blocks.
            vmem_limit_bytes=32 * 1024 * 1024,
        ),
    )(x3, w2, b2)

    return out3.reshape(N, C_out, H, W)


def _reference(x, weight, bias, sig=True):
    # Pure-JAX reference of the PyTorch forward (1x1 conv == channel matmul).
    y = jnp.einsum("nchw,oc->nohw", x,
                   weight.reshape(weight.shape[0], weight.shape[1]))
    y = y + bias[None, :, None, None]
    if sig:
        y = jax.nn.sigmoid(y)
    return y


if __name__ == "__main__":
    key = jax.random.PRNGKey(0)
    k_x, k_w, k_b = jax.random.split(key, 3)

    N, C_in, C_out, H, W = 2, 4, 3, 16, 16

    x = jax.random.normal(k_x, (N, C_in, H, W), dtype=jnp.float32)
    # Deterministic init mimicking PyTorch's default uniform(-1/sqrt(fan_in), ...)
    bound = 1.0 / jnp.sqrt(jnp.float32(C_in * 1 * 1))
    weight = jax.random.uniform(k_w, (C_out, C_in, 1, 1), jnp.float32, -bound, bound)
    bias = jax.random.uniform(k_b, (C_out,), jnp.float32, -bound, bound)

    out = outconv(x, weight, bias, sig=True)
    out = jax.block_until_ready(out)

    ref = _reference(x, weight, bias, sig=True)
    assert out.shape == (N, C_out, H, W)
    assert jnp.allclose(out, ref, atol=1e-5, rtol=1e-5)

    # Also exercise a ragged spatial size (HW % 128 != 0) to confirm the
    # no-pad / masked-final-block path is correct.
    H2, W2 = 10, 15
    x2 = jax.random.normal(k_x, (N, C_in, H2, W2), dtype=jnp.float32)
    out2 = jax.block_until_ready(outconv(x2, weight, bias, sig=True))
    ref2 = _reference(x2, weight, bias, sig=True)
    assert out2.shape == (N, C_out, H2, W2)
    assert jnp.allclose(out2, ref2, atol=1e-5, rtol=1e-5)

    print("KERNEL_OK")
</pallas_src>

<mosaic_0001>
module attributes {stable_mosaic.version = 11 : i64} {
  func.func @_outconv_kernel(%arg0: i32, %arg1: i32, %arg2: memref<1x4x128xf32, #tpu.memory_space<vmem>>, %arg3: memref<3x4xf32, #tpu.memory_space<vmem>>, %arg4: memref<3x1xf32, #tpu.memory_space<vmem>>, %arg5: memref<1x3x128xf32, #tpu.memory_space<vmem>>) attributes {dimension_semantics = [#tpu.dimension_semantics<parallel>, #tpu.dimension_semantics<parallel>], iteration_bounds = array<i64: 2, 2>, scalar_prefetch = 0 : i64, scratch_operands = 0 : i64, tpu.core_type = #tpu.core_type<tc>, window_params = [{transform_indices = @transform_0, window_bounds = array<i64: 1, 4, 128>}, {pipeline_mode = #tpu.pipeline_mode<synchronous>, transform_indices = @transform_1, window_bounds = array<i64: 3, 4>}, {pipeline_mode = #tpu.pipeline_mode<synchronous>, transform_indices = @transform_2, window_bounds = array<i64: 3, 1>}, {transform_indices = @transform_3, window_bounds = array<i64: 1, 3, 128>}]} {
    %c0 = arith.constant 0 : index
    %c0_0 = arith.constant 0 : index
    %0 = vector.load %arg3[%c0, %c0_0] : memref<3x4xf32, #tpu.memory_space<vmem>>, vector<3x4xf32>
    %c0_1 = arith.constant 0 : index
    %c0_2 = arith.constant 0 : index
    %1 = vector.load %arg4[%c0_1, %c0_2] : memref<3x1xf32, #tpu.memory_space<vmem>>, vector<3x1xf32>
    %c0_3 = arith.constant 0 : index
    %c0_4 = arith.constant 0 : index
    %c0_5 = arith.constant 0 : index
    %2 = vector.load %arg2[%c0_3, %c0_4, %c0_5] : memref<1x4x128xf32, #tpu.memory_space<vmem>>, vector<1x4x128xf32>
    %3 = vector.shape_cast %2 : vector<1x4x128xf32> to vector<4x128xf32>
    %cst = arith.constant dense<0.000000e+00> : vector<3x128xf32>
    %4 = tpu.matmul %0, %3, %cst {dimension_numbers = #tpu.dot_dimension_numbers<[1], [0], [0], [1], [0, 0, 1, 1], [], []>} : vector<3x4xf32>, vector<4x128xf32>, vector<3x128xf32> -> vector<3x128xf32>
    %5 = vector.broadcast %1 : vector<3x1xf32> to vector<3x128xf32>
    %6 = arith.addf %4, %5 : vector<3x128xf32>
    %7 = arith.negf %6 : vector<3x128xf32>
    %8 = math.exp %7 : vector<3x128xf32>
    %cst_6 = arith.constant 1.000000e+00 : f32
    %9 = vector.broadcast %cst_6 : f32 to vector<3x128xf32>
    %10 = arith.addf %9, %8 : vector<3x128xf32>
    %11 = arith.divf %9, %10 : vector<3x128xf32>
    %c0_7 = arith.constant 0 : index
    %c0_8 = arith.constant 0 : index
    %c0_9 = arith.constant 0 : index
    %12 = vector.load %arg5[%c0_7, %c0_8, %c0_9] : memref<1x3x128xf32, #tpu.memory_space<vmem>>, vector<1x3x128xf32>
    %13 = vector.shape_cast %12 : vector<1x3x128xf32> to vector<3x128xf32>
    %14 = vector.shape_cast %11 : vector<3x128xf32> to vector<1x3x128xf32>
    tpu.vector_store %arg5[%c0_7, %c0_8, %c0_9], %14 {strides = array<i32>} : memref<1x3x128xf32, #tpu.memory_space<vmem>>, vector<1x3x128xf32>,
    return
  }
  func.func @transform_0(%arg0: i32, %arg1: i32) -> (i32, i32, i32) {
    %c0_i32 = arith.constant 0 : i32
    %c0_i32_0 = arith.constant 0 : i32
    return %arg0, %c0_i32, %arg1 : i32, i32, i32
  }
  func.func @transform_1(%arg0: i32, %arg1: i32) -> (i32, i32) {
    %c0_i32 = arith.constant 0 : i32
    %c0_i32_0 = arith.constant 0 : i32
    %c0_i32_1 = arith.constant 0 : i32
    return %c0_i32, %c0_i32_0 : i32, i32
  }
  func.func @transform_2(%arg0: i32, %arg1: i32) -> (i32, i32) {
    %c0_i32 = arith.constant 0 : i32
    %c0_i32_0 = arith.constant 0 : i32
    %c0_i32_1 = arith.constant 0 : i32
    return %c0_i32, %c0_i32_0 : i32, i32
  }
  func.func @transform_3(%arg0: i32, %arg1: i32) -> (i32, i32, i32) {
    %c0_i32 = arith.constant 0 : i32
    %c0_i32_0 = arith.constant 0 : i32
    return %arg0, %c0_i32, %arg1 : i32, i32, i32
  }
}

</mosaic_0001>

<llo_original>
// kernel: tpu_custom_call.1
$region0: #{tpu_custom_call.1}
  #allocation0 [shape = 'u32[]', space=smem, size = 0x4, offset = 0x4, fixed_abs, tag = 'smem constant byte address 0x4 - core index']
  #allocation1 [shape = 'u32[144,128]{1,0:T(1,128)}', space=vmem, size = 0x12000, scoped, tag = 'internal scratch']
  %s0 = inlined_call_operand.hbm [shape: f32[2,4,256], index: 0, kind: input, shape index: {}]
  %s1 = inlined_call_operand.vmem [shape: f32[3,4], index: 1, kind: input, shape index: {}]
  %s2 = inlined_call_operand.vmem [shape: f32[3,1], index: 2, kind: input, shape index: {}]
  %s3 = inlined_call_operand.vmem [shape: f32[2,3,256], index: 3, kind: output, shape index: {}]
  %s4 = sld [smem:[#allocation0]]
  $region49: #{tpu_custom_call.1} parent=0
    _
  %s6 = ssub.s32 1, %s4
  %s7 = scalar_select 0, %s6, %s4
  $region1: #{tpu_custom_call.1} parent=0
    #allocation2 [shape = 'u8[4096]{0}', space=vmem, size = 0x1000, scoped, tag = 'input window, operand 0']
    #allocation3 [shape = 's32[2]{0}', space=sflag, size = 0x8, scoped, tag = 'scoped memory for tpu_custom_call.1']
    %8 = vsyncpa [#allocation3], 0
    %s9 = scalar_lea.sflag [#allocation3], 1
    %10 = vsyncpa %s9, 0
    loop: start=0, step=1, limit=6
    $region2: #{tpu_custom_call.1} parent=1 // loop_pre_header
      _
    $region3: #{tpu_custom_call.1} parent=1 // loop_header
      %s12 = sphi 0, %s16
      %p13 = scmp.ge.s32.totalorder %s12, 6
      %s19 = sphi 0, %s31
      %s20 = sphi 0, %s27
      %s21 = sphi 0, %s19
      %s22 = sphi 0, %s20
      %s23 = sphi 0, %s21
      %s24 = sphi 0, %s22
      %s36 = sphi 0, %s38
      %s39 = sphi 0, %s36
      %s40 = sphi 0, %s39
      %s56 = sphi 0, %s40
      %s60 = sphi 0, %s60
      %s62 = sphi 0, %s60
      %s63 = sphi 0, %s62
      %s77 = sphi 0, %s63
      %s81 = sphi 0, %s81
      %s83 = sphi 0, %s81
      %s84 = sphi 0, %s83
      %s98 = sphi 0, %s84
      %s106 = sphi 0, %s108
      %s109 = sphi 0, %s106
      %s110 = sphi 0, %s109
      %s126 = sphi 0, %s110
    $region4: #{tpu_custom_call.1} parent=1 // loop_header_branch
      %15 = sbr.rel (%p13) target = $region8
    $region5: #{tpu_custom_call.1} parent=1 // loop_body
      %s17 = ssub.s32 %s12, 1
      %s18 = ssub.s32 %s12, 2
      %s25 = sadd.s32 1, %s20
      %p26 = scmp.ge.s32.totalorder %s25, 2
      %s27 = scalar_select %p26, 0, %s25
      %s28 = sadd.s32 1, %s19
      %s29 = scalar_select %p26, %s28, %s19
      %p30 = scmp.ge.s32.totalorder %s29, 2
      %s31 = scalar_select %p30, 0, %s29
      %s32 = ssub.s32 %s19, %s31
      %s33 = ssub.s32 %s20, %s27
      %s34 = sor.u32 %s32, %s33
      %p35 = scmp.eq.s32.totalorder %s34, 0
      %s37 = sadd.s32 %s36, 1
      %s38 = scalar_select %p35, %s36, %s37
      %p41 = pneg %p35
      %p42 = scmp.eq.s32.totalorder %s12, 3
      %p43 = por %p41, %p42
      %p44 = scmp.ne.s32.totalorder %s36, %s39
      %p45 = scmp.eq.s32.totalorder %s12, 0
      %p46 = por %p44, %p45
      %p47 = scmp.ne.s32.totalorder %s36, %s39
      %p48 = scmp.eq.s32.totalorder %s17, 3
      %p49 = por %p47, %p48
      %p50 = scmp.ne.s32.totalorder %s39, %s40
      %p51 = scmp.eq.s32.totalorder %s17, 0
      %p52 = por %p50, %p51
      %p53 = scmp.ne.s32.totalorder %s39, %s40
      %p54 = scmp.eq.s32.totalorder %s18, 3
      %p55 = por %p53, %p54
      %p57 = scmp.ne.s32.totalorder %s40, %s56
      %p58 = scmp.eq.s32.totalorder %s18, 0
      %p59 = por %p57, %p58
      %s61 = sadd.s32 %s60, 1
      %p64 = scmp.eq.s32.totalorder %s12, 3
      %p65 = scmp.ne.s32.totalorder %s60, %s62
      %p66 = scmp.eq.s32.totalorder %s12, 0
      %p67 = por %p65, %p66
      %p68 = scmp.ne.s32.totalorder %s60, %s62
      %p69 = scmp.eq.s32.totalorder %s17, 3
      %p70 = por %p68, %p69
      %p71 = scmp.ne.s32.totalorder %s62, %s63
      %p72 = scmp.eq.s32.totalorder %s17, 0
      %p73 = por %p71, %p72
      %p74 = scmp.ne.s32.totalorder %s62, %s63
      %p75 = scmp.eq.s32.totalorder %s18, 3
      %p76 = por %p74, %p75
      %p78 = scmp.ne.s32.totalorder %s63, %s77
      %p79 = scmp.eq.s32.totalorder %s18, 0
      %p80 = por %p78, %p79
      %s82 = sadd.s32 %s81, 1
      %p85 = scmp.eq.s32.totalorder %s12, 3
      %p86 = scmp.ne.s32.totalorder %s81, %s83
      %p87 = scmp.eq.s32.totalorder %s12, 0
      %p88 = por %p86, %p87
      %p89 = scmp.ne.s32.totalorder %s81, %s83
      %p90 = scmp.eq.s32.totalorder %s17, 3
      %p91 = por %p89, %p90
      %p92 = scmp.ne.s32.totalorder %s83, %s84
      %p93 = scmp.eq.s32.totalorder %s17, 0
      %p94 = por %p92, %p93
      %p95 = scmp.ne.s32.totalorder %s83, %s84
      %p96 = scmp.eq.s32.totalorder %s18, 3
      %p97 = por %p95, %p96
      %p99 = scmp.ne.s32.totalorder %s84, %s98
      %p100 = scmp.eq.s32.totalorder %s18, 0
      %p101 = por %p99, %p100
      %s102 = ssub.s32 %s19, %s31
      %s103 = ssub.s32 %s20, %s27
      %s104 = sor.u32 %s102, %s103
      %p105 = scmp.eq.s32.totalorder %s104, 0
      %s107 = sadd.s32 %s106, 1
      %s108 = scalar_select %p105, %s106, %s107
      %p111 = pneg %p105
      %p112 = scmp.eq.s32.totalorder %s12, 3
      %p113 = por %p111, %p112
      %p114 = scmp.ne.s32.totalorder %s106, %s109
      %p115 = scmp.eq.s32.totalorder %s12, 0
      %p116 = por %p114, %p115
      %p117 = scmp.ne.s32.totalorder %s106, %s109
      %p118 = scmp.eq.s32.totalorder %s17, 3
      %p119 = por %p117, %p118
      %p120 = scmp.ne.s32.totalorder %s109, %s110
      %p121 = scmp.eq.s32.totalorder %s17, 0
      %p122 = por %p120, %p121
      %p123 = scmp.ne.s32.totalorder %s109, %s110
      %p124 = scmp.eq.s32.totalorder %s18, 3
      %p125 = por %p123, %p124
      %p127 = scmp.ne.s32.totalorder %s110, %s126
      %p128 = scmp.eq.s32.totalorder %s18, 0
      %p129 = por %p127, %p128
      %p130 = scmp.le.s32.totalorder 1, %s12
      %p131 = scmp.lt.s32.totalorder %s12, 5
      %p132 = pnand %p130, %p131
      %p133 = pneg %p132
      // Predicated region
      $region9: #{tpu_custom_call.1} parent=5 // pred_check
        _
      $region10: #{tpu_custom_call.1} parent=5 // pred_check_branch
        %135 = sbr.rel (%p132) target = $region12
      $region11: #{tpu_custom_call.1} parent=5 // pred_region
        %s136 = ssub.s32 %s12, 1
        // Predicated region
        $region13: #{tpu_custom_call.1} parent=11 // pred_check
          %p137 = pneg %p73
        $region14: #{tpu_custom_call.1} parent=11 // pred_check_branch
          %139 = sbr.rel (%p137) target = $region16
        $region15: #{tpu_custom_call.1} parent=11 // pred_region
          _
        $region16: #{tpu_custom_call.1} parent=11 // pred_fallthru
          _
        // Predicated region
        $region17: #{tpu_custom_call.1} parent=11 // pred_check
          %p140 = pneg %p94
        $region18: #{tpu_custom_call.1} parent=11 // pred_check_branch
          %142 = sbr.rel (%p140) target = $region20
        $region19: #{tpu_custom_call.1} parent=11 // pred_region
          _
        $region20: #{tpu_custom_call.1} parent=11 // pred_fallthru
          _
      $region12: #{tpu_custom_call.1} parent=5 // pred_fallthru
        _
      %p143 = scmp.lt.s32.totalorder %s12, 4
      // Predicated region
      $region21: #{tpu_custom_call.1} parent=5 // pred_check
        %p144 = pneg %p143
      $region22: #{tpu_custom_call.1} parent=5 // pred_check_branch
        %146 = sbr.rel (%p144) target = $region24
      $region23: #{tpu_custom_call.1} parent=5 // pred_region
        // Predicated region
        $region25: #{tpu_custom_call.1} parent=23 // pred_check
          %p147 = pneg %p46
        $region26: #{tpu_custom_call.1} parent=23 // pred_check_branch
          %149 = sbr.rel (%p147) target = $region28
        $region27: #{tpu_custom_call.1} parent=23 // pred_region
          %s150 = sand.u32 %s36, 1
          %s151 = scalar_lea.sflag [#allocation3], %s150
          %s152 = sand.u32 %s36, 1
          %s153 = smul.addr %s152, 4
          %s154 = scalar_lea.vmem [#allocation2], %s153
          %s156 = ssub.s32 64, 64
          %157 = vsyncadd %s151, %s156
          %s158 = smul.addr %s19, 2
          %s159 = sadd.s32 %s20, %s158
          %s160 = smul.addr %s159, 64
          %s161 = scalar_lea.hbm %s0, %s160
          %s163 = sshll.u32 %s154, 4
          %s164 = int_to_ptr.vmem [resolvable:$true] %s163
          %166 = dma.hbm_to_vmem [thread:$0]  %s161, 64, %s164, %s151
        $region28: #{tpu_custom_call.1} parent=23 // pred_fallthru
          _
      $region24: #{tpu_custom_call.1} parent=5 // pred_fallthru
        _
      %p167 = scmp.le.s32.totalorder 1, %s12
      %p168 = scmp.lt.s32.totalorder %s12, 5
      %p169 = pnand %p167, %p168
      %p170 = pneg %p169
      // Predicated region
      $region29: #{tpu_custom_call.1} parent=5 // pred_check
        _
      $region30: #{tpu_custom_call.1} parent=5 // pred_check_branch
        %172 = sbr.rel (%p169) target = $region32
      $region31: #{tpu_custom_call.1} parent=5 // pred_region
        %s173 = ssub.s32 %s12, 1
        %s174 = sand.u32 %s39, 1
        %s175 = scalar_lea.sflag [#allocation3], %s174
        %s176 = sand.u32 %s39, 1
        %s177 = smul.addr %s176, 4
        %s178 = scalar_lea.vmem [#allocation2], %s177
        // Predicated region
        $region33: #{tpu_custom_call.1} parent=31 // pred_check
          %p179 = pneg %p52
        $region34: #{tpu_custom_call.1} parent=31 // pred_check_branch
          %181 = sbr.rel (%p179) target = $region36
        $region35: #{tpu_custom_call.1} parent=31 // pred_region
          %182 = dma.done %s175, 64
        $region36: #{tpu_custom_call.1} parent=31 // pred_fallthru
          _
        %s183 = sand.u32 %s39, 1
        %s184 = scalar_lea.sflag [#allocation3], %s183
        %s185 = sand.u32 %s39, 1
        %s186 = smul.addr %s185, 4
        %s187 = scalar_lea.vmem [#allocation2], %s186
        %p188 = pneg %p52
        %p189 = pneg %p49
        %p190 = pneg %p73
        %p191 = pneg %p70
        %p192 = pneg %p94
        %p193 = pneg %p91
        %p194 = pneg %p122
        %p195 = pneg %p119
        %p196 = scmp.lt.s32.totalorder %s21, 1
        %s197 = scalar_select %p196, %s21, 1
        %p198 = scmp.lt.s32.totalorder %s22, 1
        %s199 = scalar_select %p198, %s22, 1
        %s200 = smul.addr %s197, 2
        %s201 = sadd.s32 %s199, %s200
        %s202 = smul.addr %s201, 4
        %s203 = scalar_lea.vmem %s3, %s202
        %p204 = scmp.lt.s32.totalorder %s21, 1
        %s205 = scalar_select %p204, %s21, 1
        %p206 = scmp.lt.s32.totalorder %s22, 1
        %s207 = scalar_select %p206, %s22, 1
        %s208 = smul.addr %s205, 2
        %s209 = sadd.s32 %s207, %s208
        %s210 = smul.addr %s209, 4
        %s211 = scalar_lea.vmem %s3, %s210
        %v212 = vld [vmem:[%s1] sm:$0x7]
        %v213 = vld [vmem:[%s2] sm:$0x7]
        %v214 = vld [vmem:[%s178] sm:$0xf]
        %216 = vset.pattern.permute.xlu0 0
        %217 = vperm.xlu0 %216, %v213
        %v218 = vpop.permute.xlu0 %217
        %vm220 = vcmask 31744
        %v222 = vsel %vm220, %v212, 0
        %vm224 = vcmask 1043456
        %v226 = vsel %vm224, %v214, 0
        %228 = vmatprep.subr.mxu0 0.0
        %229 = vmatpush1.msra.mxu0 %v226
        %230 = vmatprep.subr.mxu0 0.0
        %231 = vmatpush1.msra.mxu0 0.0
        %232 = vmatprep.subr.mxu0 0.0
        %233 = vmatpush1.msra.mxu0 0.0
        %234 = vmatprep.subr.mxu0 0.0
        %235 = vmatpush1.msra.mxu0 0.0
        %236 = vmatprep.subr.mxu0 0.0
        %237 = vmatpush1.msra.mxu0 0.0
        %238 = vmatprep.subr.mxu0 0.0
        %239 = vmatpush1.msra.mxu0 0.0
        %240 = vmatprep.subr.mxu0 0.0
        %241 = vmatpush1.msra.mxu0 0.0
        %242 = vmatprep.subr.mxu0 0.0
        %243 = vmatpush1.msra.mxu0 0.0
        %244 = vmatprep.subr.mxu0 0.0
        %245 = vmatpush1.msra.mxu0 0.0
        %246 = vmatprep.subr.mxu0 0.0
        %247 = vmatpush1.msra.mxu0 0.0
        %248 = vmatprep.subr.mxu0 0.0
        %249 = vmatpush1.msra.mxu0 0.0
        %250 = vmatprep.subr.mxu0 0.0
        %251 = vmatpush1.msra.mxu0 0.0
        %252 = vmatprep.subr.mxu0 0.0
        %253 = vmatpush1.msra.mxu0 0.0
        %254 = vmatprep.subr.mxu0 0.0
        %255 = vmatpush1.msra.mxu0 0.0
        %256 = vmatprep.subr.mxu0 0.0
        %257 = vmatpush1.msra.mxu0 0.0
        %258 = vmatprep.subr.mxu0 0.0
        %259 = vmatpush1.msra.mxu0 0.0
        %260 = vmatprep.subr.mxu0 0.0
        %261 = vmatpush1.msra.mxu0 0.0
        %262 = vmatprep.subr.mxu0 0.0
        %263 = vmatpush1.msra.mxu0 0.0
        %264 = vmatprep.subr.mxu0 0.0
        %265 = vmatpush1.msra.mxu0 0.0
        %266 = vmatprep.subr.mxu0 0.0
        %267 = vmatpush1.msra.mxu0 0.0
        %268 = vmatprep.subr.mxu0 0.0
        %269 = vmatpush1.msra.mxu0 0.0
        %270 = vmatprep.subr.mxu0 0.0
        %271 = vmatpush1.msra.mxu0 0.0
        %272 = vmatprep.subr.mxu0 0.0
        %273 = vmatpush1.msra.mxu0 0.0
        %274 = vmatprep.subr.mxu0 0.0
        %275 = vmatpush1.msra.mxu0 0.0
        %276 = vmatprep.subr.mxu0 0.0
        %277 = vmatpush1.msra.mxu0 0.0
        %278 = vmatprep.subr.mxu0 0.0
        %279 = vmatpush1.msra.mxu0 0.0
        %280 = vmatprep.subr.mxu0 0.0
        %281 = vmatpush1.msra.mxu0 0.0
        %282 = vmatprep.subr.mxu0 0.0
        %283 = vmatpush1.msra.mxu0 0.0
        %284 = vmatprep.subr.mxu0 0.0
        %285 = vmatpush1.msra.mxu0 0.0
        %286 = vmatprep.subr.mxu0 0.0
        %287 = vmatpush1.msra.mxu0 0.0
        %288 = vmatprep.subr.mxu0 0.0
        %289 = vmatpush1.msra.mxu0 0.0
        %290 = vmatprep.subr.mxu0 0.0
        %291 = vmatpush1.msra.mxu0 0.0
        %292 = vmatprep.mubr.f32.mxu0 0.0
        %293 = vmatmul.mubr.f32.gmra.mrb[0].mxu0 %v222
        %v294 = vpop.f32.mrb[0].mxu0
        %v295 = vadd.f32 %v218, %v294
        %v296 = vpop.f32.mrb[0].mxu0
        %297 = vdwg.mxu0
        %v298 = vxor.u32 %v295, 2147483648
        %v299 = vmul.f32 %v298, 1.442695
        %v300 = vpow.pop %v299
        %v301 = vadd.f32 %v300, 1.0
        %v302 = vrcp.pop %v301
        %v303 = vmul.f32 1.0, %v302
        %304 = vst [vmem:[%s211] sm:$0x7] %v303
        %p305 = scmp.lt.s32.totalorder %s21, 1
        %s306 = scalar_select %p305, %s21, 1
        %p307 = scmp.lt.s32.totalorder %s22, 1
        %s308 = scalar_select %p307, %s22, 1
        %s309 = smul.addr %s306, 2
        %s310 = sadd.s32 %s308, %s309
        %s311 = smul.addr %s310, 4
        %s312 = scalar_lea.vmem %s3, %s311
        // Predicated region
        $region37: #{tpu_custom_call.1} parent=31 // pred_check
          %p313 = pneg %p119
        $region38: #{tpu_custom_call.1} parent=31 // pred_check_branch
          %315 = sbr.rel (%p313) target = $region40
        $region39: #{tpu_custom_call.1} parent=31 // pred_region
          _
        $region40: #{tpu_custom_call.1} parent=31 // pred_fallthru
          _
      $region32: #{tpu_custom_call.1} parent=5 // pred_fallthru
        _
      %p316 = scmp.le.s32.totalorder 2, %s12
      // Predicated region
      $region41: #{tpu_custom_call.1} parent=5 // pred_check
        %p317 = pneg %p316
      $region42: #{tpu_custom_call.1} parent=5 // pred_check_branch
        %319 = sbr.rel (%p317) target = $region44
      $region43: #{tpu_custom_call.1} parent=5 // pred_region
        %s320 = ssub.s32 %s12, 2
        // Predicated region
        $region45: #{tpu_custom_call.1} parent=43 // pred_check
          %p321 = pneg %p125
        $region46: #{tpu_custom_call.1} parent=43 // pred_check_branch
          %323 = sbr.rel (%p321) target = $region48
        $region47: #{tpu_custom_call.1} parent=43 // pred_region
          %p324 = scmp.lt.s32.totalorder %s23, 1
          %s325 = scalar_select %p324, %s23, 1
          %p326 = scmp.lt.s32.totalorder %s24, 1
          %s327 = scalar_select %p326, %s24, 1
          %s328 = smul.addr %s325, 2
          %s329 = sadd.s32 %s327, %s328
          %s330 = smul.addr %s329, 4
          %s331 = scalar_lea.vmem %s3, %s330
        $region48: #{tpu_custom_call.1} parent=43 // pred_fallthru
          _
      $region44: #{tpu_custom_call.1} parent=5 // pred_fallthru
        _
    $region6: #{tpu_custom_call.1} parent=1 // loop_footer
      %s16 = sadd.s32 1, %s12
    $region7: #{tpu_custom_call.1} parent=1 // loop_footer_branch
      %11 = sbr.rel target = $region3
    $region8: #{tpu_custom_call.1} parent=1 // loop_exit
      _
    %332 = vsyncpa [#allocation3], 1
    %s333 = scalar_lea.sflag [#allocation3], 1
    %334 = vsyncpa %s333, 1

</llo_original>
